<compile_context>
chip_gen: v7x
topology: tpu7x:2x2x1
jax: 0.10.0
libtpu: 0.0.40
codegen_flags: <defaults>
</compile_context>

<pallas_src>
import math

import jax
import jax.numpy as jnp
from jax import lax
from jax.experimental import pallas as pl
from jax.experimental.pallas import tpu as pltpu


def stock_embedding_kernel(x_ref, w_ref, add_ref, o_ref):
    """One grid step = TB batch elements.

    x_ref  : (TB*F, P)        VMEM  (NCL x, batch-major rows of F features; dense)
    w_ref  : (F, E)           VMEM  (Linear weight, pre-transposed, grid-invariant)
    add_ref: (P, E) or (1, E) VMEM  (positional table with bias folded in / bias row)
    o_ref  : (TB, P, E)       VMEM
    """
    w = w_ref[...]
    add = add_ref[...].astype(jnp.float32)
    f = w_ref.shape[0]
    tb = o_ref.shape[0]
    for b in range(tb):  # static, small unroll (wrapper caps tb)
        # (F, P) contracted on F against (F, E) -> (P, E).  The MXU handles the
        # transposed-LHS contraction directly; no data transpose anywhere.
        acc = lax.dot_general(
            x_ref[pl.ds(b * f, f), :], w,
            dimension_numbers=(((0,), (0,)), ((), ())),
            preferred_element_type=jnp.float32)
        o_ref[b] = (acc + add).astype(o_ref.dtype)


def make_positional_embedding(d_model, max_len):
    """Deterministic sin/cos table identical to PositionalEmbedding.__init__."""
    position = jnp.arange(0, max_len, dtype=jnp.float32)[:, None]          # (L, 1)
    div_term = jnp.exp(jnp.arange(0, d_model, 2, dtype=jnp.float32)
                       * -(math.log(10000.0) / d_model))                   # (E/2,)
    pe = jnp.zeros((max_len, d_model), dtype=jnp.float32)
    pe = pe.at[:, 0::2].set(jnp.sin(position * div_term))
    pe = pe.at[:, 1::2].set(jnp.cos(position * div_term))
    return pe                                                              # (L, E)


def stock_embedding(stock_sequence, weight, bias, pe, order_emb=True,
                    out_dtype=None, param_dtype=None, max_unroll=16):
    """stock_sequence: (B, feature_num, period)  float32 or bfloat16 (NCL layout)
       weight        : (embed_size, feature_num) (PyTorch Linear layout)
       bias          : (embed_size,)
       pe            : (max_len, embed_size)     float32
    returns           (B, period, embed_size)    out_dtype (default: x dtype)
    """
    B, F, P = stock_sequence.shape
    E = weight.shape[0]
    x_dtype = stock_sequence.dtype
    out_dtype = x_dtype if out_dtype is None else out_dtype
    # MXU fast path: weight in the activation dtype by default.  Pass f32
    # activations (or param_dtype=jnp.float32) to keep exact f32 Linear weights.
    param_dtype = x_dtype if param_dtype is None else param_dtype

    x_flat = stock_sequence.reshape(B * F, P)                  # free contiguous collapse
    w_fe = jnp.transpose(weight, (1, 0)).astype(param_dtype)   # (F, E), tiny

    if order_emb:
        # Fold the Linear bias into the positional table: one fewer input stream.
        add = pe[:P, :].astype(jnp.float32) + bias[None, :].astype(jnp.float32)
    else:
        # No pointless zero-table DMA: just the bias row, broadcast in-kernel.
        add = bias.reshape(1, E).astype(jnp.float32)
    P_add = add.shape[0]

    x_item = jnp.dtype(x_dtype).itemsize
    w_item = jnp.dtype(param_dtype).itemsize
    o_item = jnp.dtype(out_dtype).itemsize

    # ---- TB from an explicit per-step VMEM byte budget -----------------------
    try:  # v7x has 64 MiB VMEM (vs 128 MiB v5e/v6e); query instead of hardcoding.
        vmem_cap = pltpu.get_tpu_info().vmem_capacity_bytes
    except Exception:
        vmem_cap = 64 << 20
    budget = min(10 << 20, vmem_cap // 6)   # also stays under v5e's 16 MiB scoped default

    const_bytes = 2 * (F * E * w_item + P_add * E * 4)     # double-buffered invariants
    per_batch = 2 * (F * P * x_item + P * E * o_item)      # double-buffered x + out
    tb_cap = max(1, (budget - const_bytes) // max(per_batch, 1))

    tb = int(min(tb_cap, max_unroll, B))
    if B >= 2:
        tb = min(tb, pl.cdiv(B, 2))   # >= 2 grid steps: keep both v7x TCs streaming

    # Flattened x block's leading dim (tb*F) must be a multiple of 8 unless it
    # spans the whole array; round tb to satisfy the (8, 128) block constraint.
    tb_step = 8 // math.gcd(F, 8)
    if tb % tb_step != 0:
        tb = (tb // tb_step) * tb_step
    if tb < 1:
        tb = tb_step if tb_step <= B else B   # tb == B -> full-extent block (valid)
    tb = min(tb, B)

    grid = (pl.cdiv(B, tb),)

    cost = pl.CostEstimate(
        flops=2 * B * P * F * E,
        transcendentals=0,
        bytes_accessed=(B * F * P * x_item        # x
                        + F * E * w_item          # weight
                        + P_add * E * 4           # pe (+bias)
                        + B * P * E * o_item))    # output

    out = pl.pallas_call(
        stock_embedding_kernel,
        out_shape=jax.ShapeDtypeStruct((B, P, E), out_dtype),
        grid_spec=pltpu.PrefetchScalarGridSpec(
            num_scalar_prefetch=0,
            grid=grid,
            in_specs=[
                pl.BlockSpec((tb * F, P), lambda i: (i, 0)),    # per-step x slab
                pl.BlockSpec((F, E), lambda i: (0, 0)),         # weight (grid-invariant)
                pl.BlockSpec((P_add, E), lambda i: (0, 0)),     # pe+bias (grid-invariant)
            ],
            out_specs=pl.BlockSpec((tb, P, E), lambda i: (i, 0, 0)),
        ),
        compiler_params=pltpu.CompilerParams(
            dimension_semantics=("parallel",)),
        cost_estimate=cost,
    )(x_flat, w_fe, add)
    # TODO(synk): Dropout with p>0 (training mode) not implemented; module default
    # p=0 / eval mode makes it the identity.
    return out


def reference(stock_sequence, weight, bias, pe, order_emb=True):
    x = jnp.transpose(stock_sequence, (0, 2, 1)).astype(jnp.float32)
    tok = jnp.einsum("bpf,ef->bpe", x, weight.astype(jnp.float32)) + bias
    if order_emb:
        tok = tok + pe[: x.shape[1], :][None]
    return tok


if __name__ == "__main__":
    # Small, module-consistent shapes: period=16, feature_num=8, embed_size=32, batch=2.
    B, F, P, E = 2, 8, 16, 32
    max_len = 64  # "period" arg of stockEmbedding (>= sequence length)

    key = jax.random.PRNGKey(0)
    kx, kw, kb = jax.random.split(key, 3)

    stock_sequence = jax.random.normal(kx, (B, F, P), dtype=jnp.float32)

    # Deterministic Linear params (PyTorch-style uniform(-1/sqrt(F), 1/sqrt(F))).
    bound = 1.0 / math.sqrt(F)
    weight = jax.random.uniform(kw, (E, F), minval=-bound, maxval=bound,
                                dtype=jnp.float32)
    bias = jax.random.uniform(kb, (E,), minval=-bound, maxval=bound,
                              dtype=jnp.float32)

    pe = make_positional_embedding(d_model=E, max_len=max_len)

    # bf16 activations / weights on the MXU fast path; f32 accumulation in-kernel;
    # bf16 output (halves the dominant HBM stream), cast only at the final store.
    x_bf16 = stock_sequence.astype(jnp.bfloat16)
    w_bf16 = weight.astype(jnp.bfloat16)

    out = stock_embedding(x_bf16, w_bf16, bias, pe, order_emb=True)
    out = jax.block_until_ready(out)

    # Reference sees the same bf16-rounded inputs but computes in f32; kernel adds
    # only one final bf16 rounding plus accumulation-order noise.
    ref = reference(x_bf16, w_bf16, bias, pe, order_emb=True)
    assert out.shape == (B, P, E)
    assert out.dtype == jnp.bfloat16
    assert jnp.allclose(out.astype(jnp.float32), ref, atol=3e-2, rtol=3e-2)

    print("KERNEL_OK")
</pallas_src>

<mosaic_0001>
module attributes {stable_mosaic.version = 11 : i64} {
  func.func @stock_embedding_kernel(%arg0: i32, %arg1: memref<8x16xbf16, #tpu.memory_space<vmem>>, %arg2: memref<8x32xbf16, #tpu.memory_space<vmem>>, %arg3: memref<16x32xf32, #tpu.memory_space<vmem>>, %arg4: memref<1x16x32xbf16, #tpu.memory_space<vmem>>) attributes {dimension_semantics = [#tpu.dimension_semantics<parallel>], iteration_bounds = array<i64: 2>, scalar_prefetch = 0 : i64, scratch_operands = 0 : i64, tpu.core_type = #tpu.core_type<tc>, window_params = [{transform_indices = @transform_0, window_bounds = array<i64: 8, 16>}, {pipeline_mode = #tpu.pipeline_mode<synchronous>, transform_indices = @transform_1, window_bounds = array<i64: 8, 32>}, {pipeline_mode = #tpu.pipeline_mode<synchronous>, transform_indices = @transform_2, window_bounds = array<i64: 16, 32>}, {transform_indices = @transform_3, window_bounds = array<i64: 1, 16, 32>}]} {
    %c0 = arith.constant 0 : index
    %c0_0 = arith.constant 0 : index
    %0 = vector.load %arg2[%c0, %c0_0] : memref<8x32xbf16, #tpu.memory_space<vmem>>, vector<8x32xbf16>
    %c0_1 = arith.constant 0 : index
    %c0_2 = arith.constant 0 : index
    %1 = vector.load %arg3[%c0_1, %c0_2] : memref<16x32xf32, #tpu.memory_space<vmem>>, vector<16x32xf32>
    %c0_3 = arith.constant 0 : index
    %c0_4 = arith.constant 0 : index
    %2 = vector.load %arg1[%c0_3, %c0_4] : memref<8x16xbf16, #tpu.memory_space<vmem>>, vector<8x16xbf16>
    %cst = arith.constant dense<0.000000e+00> : vector<16x32xf32>
    %3 = tpu.matmul %2, %0, %cst {dimension_numbers = #tpu.dot_dimension_numbers<[0], [0], [1], [1], [0, 1, 1, 1], [], []>} : vector<8x16xbf16>, vector<8x32xbf16>, vector<16x32xf32> -> vector<16x32xf32>
    %4 = arith.addf %3, %1 : vector<16x32xf32>
    %5 = arith.truncf %4 : vector<16x32xf32> to vector<16x32xbf16>
    %c0_5 = arith.constant 0 : index
    %c0_6 = arith.constant 0 : index
    %c0_7 = arith.constant 0 : index
    %6 = vector.load %arg4[%c0_5, %c0_6, %c0_7] : memref<1x16x32xbf16, #tpu.memory_space<vmem>>, vector<1x16x32xbf16>
    %7 = vector.shape_cast %6 : vector<1x16x32xbf16> to vector<16x32xbf16>
    %8 = vector.shape_cast %5 : vector<16x32xbf16> to vector<1x16x32xbf16>
    tpu.vector_store %arg4[%c0_5, %c0_6, %c0_7], %8 {strides = array<i32>} : memref<1x16x32xbf16, #tpu.memory_space<vmem>>, vector<1x16x32xbf16>,
    return
  }
  func.func @transform_0(%arg0: i32) -> (i32, i32) {
    %c0_i32 = arith.constant 0 : i32
    %c0_i32_0 = arith.constant 0 : i32
    return %arg0, %c0_i32 : i32, i32
  }
  func.func @transform_1(%arg0: i32) -> (i32, i32) {
    %c0_i32 = arith.constant 0 : i32
    %c0_i32_0 = arith.constant 0 : i32
    %c0_i32_1 = arith.constant 0 : i32
    return %c0_i32, %c0_i32_0 : i32, i32
  }
  func.func @transform_2(%arg0: i32) -> (i32, i32) {
    %c0_i32 = arith.constant 0 : i32
    %c0_i32_0 = arith.constant 0 : i32
    %c0_i32_1 = arith.constant 0 : i32
    return %c0_i32, %c0_i32_0 : i32, i32
  }
  func.func @transform_3(%arg0: i32) -> (i32, i32, i32) {
    %c0_i32 = arith.constant 0 : i32
    %c0_i32_0 = arith.constant 0 : i32
    %c0_i32_1 = arith.constant 0 : i32
    return %arg0, %c0_i32, %c0_i32_0 : i32, i32, i32
  }
}

</mosaic_0001>

<llo_original>
// kernel: tpu_custom_call.1
$region0: #{tpu_custom_call.1}
  #allocation0 [shape = 'u32[]', space=smem, size = 0x4, offset = 0x4, fixed_abs, tag = 'smem constant byte address 0x4 - core index']
  #allocation1 [shape = 'u32[144,128]{1,0:T(1,128)}', space=vmem, size = 0x12000, scoped, tag = 'internal scratch']
  %s0 = inlined_call_operand.hbm [shape: bf16[16,16], index: 0, kind: input, shape index: {}]
  %s1 = inlined_call_operand.hbm [shape: bf16[8,32], index: 1, kind: input, shape index: {}]
  %s2 = inlined_call_operand.hbm [shape: f32[16,32], index: 2, kind: input, shape index: {}]
  %s3 = inlined_call_operand.hbm [shape: bf16[2,16,32], index: 3, kind: output, shape index: {}]
  %s4 = sld [smem:[#allocation0]]
  $region57: #{tpu_custom_call.1} parent=0
    _
  %s6 = ssub.s32 1, %s4
  %s7 = scalar_select 0, %s6, %s4
  $region1: #{tpu_custom_call.1} parent=0
    #allocation2 [shape = 'u8[4096]{0}', space=vmem, size = 0x1000, scoped, tag = 'input window, operand 0']
    #allocation3 [shape = 's32[2]{0}', space=sflag, size = 0x8, scoped, tag = 'scoped memory for tpu_custom_call.1']
    #allocation4 [shape = 's32[2]{0}', space=sflag, size = 0x8, scoped, tag = 'scoped memory for tpu_custom_call.1']
    #allocation5 [shape = 'u8[2048]{0}', space=vmem, size = 0x800, scoped, tag = 'input window, operand 1, single buffered']
    #allocation6 [shape = 's32[1]{0}', space=sflag, size = 0x4, scoped, tag = 'scoped memory for tpu_custom_call.1']
    #allocation7 [shape = 'u8[8192]{0}', space=vmem, size = 0x2000, scoped, tag = 'input window, operand 2, single buffered']
    #allocation8 [shape = 'u8[8192]{0}', space=vmem, size = 0x2000, scoped, tag = 'output window, operand 0']
    %8 = vsyncpa [#allocation3], 0
    %s9 = scalar_lea.sflag [#allocation3], 1
    %10 = vsyncpa %s9, 0
    %11 = vsyncpa [#allocation6], 0
    %12 = vsyncpa [#allocation4], 0
    %s13 = scalar_lea.sflag [#allocation4], 1
    %14 = vsyncpa %s13, 0
    loop: start=0, step=1, limit=4
    $region2: #{tpu_custom_call.1} parent=1 // loop_pre_header
      _
    $region3: #{tpu_custom_call.1} parent=1 // loop_header
      %s16 = sphi 0, %s20
      %p17 = scmp.ge.s32.totalorder %s16, 4
      %s26 = sphi 0, %s28
      %s29 = sphi 0, %s26
      %s30 = sphi 0, %s29
      %s46 = sphi 0, %s30
      %s50 = sphi 0, %s50
      %s52 = sphi 0, %s50
      %s53 = sphi 0, %s52
      %s67 = sphi 0, %s53
      %s71 = sphi 0, %s71
      %s73 = sphi 0, %s71
      %s74 = sphi 0, %s73
      %s88 = sphi 0, %s74
      %s94 = sphi 0, %s96
      %s97 = sphi 0, %s94
      %s98 = sphi 0, %s97
      %s114 = sphi 0, %s98
    $region4: #{tpu_custom_call.1} parent=1 // loop_header_branch
      %19 = sbr.rel (%p17) target = $region8
    $region5: #{tpu_custom_call.1} parent=1 // loop_body
      %s21 = ssub.s32 %s16, 1
      %s22 = ssub.s32 %s16, 2
      %s23 = sadd.s32 %s16, 1
      %s24 = ssub.s32 %s16, %s23
      %p25 = scmp.eq.s32.totalorder %s24, 0
      %s27 = sadd.s32 %s26, 1
      %s28 = scalar_select %p25, %s26, %s27
      %p31 = pneg %p25
      %p32 = scmp.eq.s32.totalorder %s16, 1
      %p33 = por %p31, %p32
      %p34 = scmp.ne.s32.totalorder %s26, %s29
      %p35 = scmp.eq.s32.totalorder %s16, 0
      %p36 = por %p34, %p35
      %p37 = scmp.ne.s32.totalorder %s26, %s29
      %p38 = scmp.eq.s32.totalorder %s21, 1
      %p39 = por %p37, %p38
      %p40 = scmp.ne.s32.totalorder %s29, %s30
      %p41 = scmp.eq.s32.totalorder %s21, 0
      %p42 = por %p40, %p41
      %p43 = scmp.ne.s32.totalorder %s29, %s30
      %p44 = scmp.eq.s32.totalorder %s22, 1
      %p45 = por %p43, %p44
      %p47 = scmp.ne.s32.totalorder %s30, %s46
      %p48 = scmp.eq.s32.totalorder %s22, 0
      %p49 = por %p47, %p48
      %s51 = sadd.s32 %s50, 1
      %p54 = scmp.eq.s32.totalorder %s16, 1
      %p55 = scmp.ne.s32.totalorder %s50, %s52
      %p56 = scmp.eq.s32.totalorder %s16, 0
      %p57 = por %p55, %p56
      %p58 = scmp.ne.s32.totalorder %s50, %s52
      %p59 = scmp.eq.s32.totalorder %s21, 1
      %p60 = por %p58, %p59
      %p61 = scmp.ne.s32.totalorder %s52, %s53
      %p62 = scmp.eq.s32.totalorder %s21, 0
      %p63 = por %p61, %p62
      %p64 = scmp.ne.s32.totalorder %s52, %s53
      %p65 = scmp.eq.s32.totalorder %s22, 1
      %p66 = por %p64, %p65
      %p68 = scmp.ne.s32.totalorder %s53, %s67
      %p69 = scmp.eq.s32.totalorder %s22, 0
      %p70 = por %p68, %p69
      %s72 = sadd.s32 %s71, 1
      %p75 = scmp.eq.s32.totalorder %s16, 1
      %p76 = scmp.ne.s32.totalorder %s71, %s73
      %p77 = scmp.eq.s32.totalorder %s16, 0
      %p78 = por %p76, %p77
      %p79 = scmp.ne.s32.totalorder %s71, %s73
      %p80 = scmp.eq.s32.totalorder %s21, 1
      %p81 = por %p79, %p80
      %p82 = scmp.ne.s32.totalorder %s73, %s74
      %p83 = scmp.eq.s32.totalorder %s21, 0
      %p84 = por %p82, %p83
      %p85 = scmp.ne.s32.totalorder %s73, %s74
      %p86 = scmp.eq.s32.totalorder %s22, 1
      %p87 = por %p85, %p86
      %p89 = scmp.ne.s32.totalorder %s74, %s88
      %p90 = scmp.eq.s32.totalorder %s22, 0
      %p91 = por %p89, %p90
      %s92 = ssub.s32 %s16, %s23
      %p93 = scmp.eq.s32.totalorder %s92, 0
      %s95 = sadd.s32 %s94, 1
      %s96 = scalar_select %p93, %s94, %s95
      %p99 = pneg %p93
      %p100 = scmp.eq.s32.totalorder %s16, 1
      %p101 = por %p99, %p100
      %p102 = scmp.ne.s32.totalorder %s94, %s97
      %p103 = scmp.eq.s32.totalorder %s16, 0
      %p104 = por %p102, %p103
      %p105 = scmp.ne.s32.totalorder %s94, %s97
      %p106 = scmp.eq.s32.totalorder %s21, 1
      %p107 = por %p105, %p106
      %p108 = scmp.ne.s32.totalorder %s97, %s98
      %p109 = scmp.eq.s32.totalorder %s21, 0
      %p110 = por %p108, %p109
      %p111 = scmp.ne.s32.totalorder %s97, %s98
      %p112 = scmp.eq.s32.totalorder %s22, 1
      %p113 = por %p111, %p112
      %p115 = scmp.ne.s32.totalorder %s98, %s114
      %p116 = scmp.eq.s32.totalorder %s22, 0
      %p117 = por %p115, %p116
      %p118 = scmp.le.s32.totalorder 1, %s16
      %p119 = scmp.lt.s32.totalorder %s16, 3
      %p120 = pnand %p118, %p119
      %p121 = pneg %p120
      // Predicated region
      $region9: #{tpu_custom_call.1} parent=5 // pred_check
        _
      $region10: #{tpu_custom_call.1} parent=5 // pred_check_branch
        %123 = sbr.rel (%p120) target = $region12
      $region11: #{tpu_custom_call.1} parent=5 // pred_region
        %s124 = ssub.s32 %s16, 1
        // Predicated region
        $region13: #{tpu_custom_call.1} parent=11 // pred_check
          %p125 = pneg %p63
        $region14: #{tpu_custom_call.1} parent=11 // pred_check_branch
          %127 = sbr.rel (%p125) target = $region16
        $region15: #{tpu_custom_call.1} parent=11 // pred_region
          %s129 = ssub.s32 64, 64
          %130 = vsyncadd [#allocation6], %s129
          %s132 = sshll.u32 [#allocation5], 4
          %s133 = int_to_ptr.vmem [resolvable:$true] %s132
          %135 = dma.hbm_to_vmem [thread:$0]  %s1, 64, %s133, [#allocation6]
        $region16: #{tpu_custom_call.1} parent=11 // pred_fallthru
          _
        // Predicated region
        $region17: #{tpu_custom_call.1} parent=11 // pred_check
          %p136 = pneg %p84
        $region18: #{tpu_custom_call.1} parent=11 // pred_check_branch
          %138 = sbr.rel (%p136) target = $region20
        $region19: #{tpu_custom_call.1} parent=11 // pred_region
          %s140 = ssub.s32 256, 256
          %141 = vsyncadd [#allocation6], %s140
          %s142 = sshll.u32 [#allocation7], 4
          %s143 = int_to_ptr.vmem [resolvable:$true] %s142
          %148 = dma.hbm_to_vmem [thread:$0]  %s2, 256, %s143, [#allocation6], 128, 128, 8
        $region20: #{tpu_custom_call.1} parent=11 // pred_fallthru
          _
      $region12: #{tpu_custom_call.1} parent=5 // pred_fallthru
        _
      %p149 = scmp.lt.s32.totalorder %s16, 2
      // Predicated region
      $region21: #{tpu_custom_call.1} parent=5 // pred_check
        %p150 = pneg %p149
      $region22: #{tpu_custom_call.1} parent=5 // pred_check_branch
        %152 = sbr.rel (%p150) target = $region24
      $region23: #{tpu_custom_call.1} parent=5 // pred_region
        // Predicated region
        $region25: #{tpu_custom_call.1} parent=23 // pred_check
          %p153 = pneg %p36
        $region26: #{tpu_custom_call.1} parent=23 // pred_check_branch
          %155 = sbr.rel (%p153) target = $region28
        $region27: #{tpu_custom_call.1} parent=23 // pred_region
          %s156 = sand.u32 %s26, 1
          %s157 = scalar_lea.sflag [#allocation3], %s156
          %s158 = sand.u32 %s26, 1
          %s159 = smul.addr %s158, 4
          %s160 = scalar_lea.vmem [#allocation2], %s159
          %s162 = ssub.s32 64, 64
          %163 = vsyncadd %s157, %s162
          %s164 = smul.addr %s16, 64
          %s165 = scalar_lea.hbm %s0, %s164
          %s167 = sshll.u32 %s160, 4
          %s168 = int_to_ptr.vmem [resolvable:$true] %s167
          %170 = dma.hbm_to_vmem [thread:$0]  %s165, 64, %s168, %s157
        $region28: #{tpu_custom_call.1} parent=23 // pred_fallthru
          _
      $region24: #{tpu_custom_call.1} parent=5 // pred_fallthru
        _
      %p171 = scmp.le.s32.totalorder 1, %s16
      %p172 = scmp.lt.s32.totalorder %s16, 3
      %p173 = pnand %p171, %p172
      %p174 = pneg %p173
      // Predicated region
      $region29: #{tpu_custom_call.1} parent=5 // pred_check
        _
      $region30: #{tpu_custom_call.1} parent=5 // pred_check_branch
        %176 = sbr.rel (%p173) target = $region32
      $region31: #{tpu_custom_call.1} parent=5 // pred_region
        %s177 = ssub.s32 %s16, 1
        %s178 = sand.u32 %s29, 1
        %s179 = scalar_lea.sflag [#allocation3], %s178
        %s180 = sand.u32 %s29, 1
        %s181 = smul.addr %s180, 4
        %s182 = scalar_lea.vmem [#allocation2], %s181
        // Predicated region
        $region33: #{tpu_custom_call.1} parent=31 // pred_check
          %p183 = pneg %p42
        $region34: #{tpu_custom_call.1} parent=31 // pred_check_branch
          %185 = sbr.rel (%p183) target = $region36
        $region35: #{tpu_custom_call.1} parent=31 // pred_region
          %186 = dma.done %s179, 64
        $region36: #{tpu_custom_call.1} parent=31 // pred_fallthru
          _
        // Predicated region
        $region37: #{tpu_custom_call.1} parent=31 // pred_check
          %p187 = pneg %p63
        $region38: #{tpu_custom_call.1} parent=31 // pred_check_branch
          %189 = sbr.rel (%p187) target = $region40
        $region39: #{tpu_custom_call.1} parent=31 // pred_region
          %190 = dma.done [#allocation6], 64
        $region40: #{tpu_custom_call.1} parent=31 // pred_fallthru
          _
        // Predicated region
        $region41: #{tpu_custom_call.1} parent=31 // pred_check
          %p191 = pneg %p84
        $region42: #{tpu_custom_call.1} parent=31 // pred_check_branch
          %193 = sbr.rel (%p191) target = $region44
        $region43: #{tpu_custom_call.1} parent=31 // pred_region
          %194 = dma.done [#allocation6], 256
        $region44: #{tpu_custom_call.1} parent=31 // pred_fallthru
          _
        %s195 = sand.u32 %s29, 1
        %s196 = scalar_lea.sflag [#allocation3], %s195
        %s197 = sand.u32 %s29, 1
        %s198 = smul.addr %s197, 4
        %s199 = scalar_lea.vmem [#allocation2], %s198
        %p200 = pneg %p42
        %p201 = pneg %p39
        %p202 = pneg %p63
        %p203 = pneg %p60
        %p204 = pneg %p84
        %p205 = pneg %p81
        %p206 = pneg %p110
        %p207 = pneg %p107
        %s208 = sand.u32 %s97, 1
        %s209 = scalar_lea.sflag [#allocation4], %s208
        %s210 = sand.u32 %s97, 1
        %s211 = smul.addr %s210, 8
        %s212 = scalar_lea.vmem [#allocation8], %s211
        %v214 = vld [vmem:[#allocation5] sm:$0xf]
        %v215 = vld [vmem:[#allocation7] sm:$0xff]
        %v216 = vld [vmem:[#allocation7 + $0x8] sm:$0xff]
        %v217 = vld [vmem:[%s182] sm:$0xf]
        %218 = vxpose.xlu0.c.b16.start [1/8] %v217, 128
        %219 = vxpose.xlu0.c.b16.cont [2/8] 0, 128
        %220 = vxpose.xlu0.c.b16.cont [3/8] 0, 128
        %221 = vxpose.xlu0.c.b16.cont [4/8] 0, 128
        %222 = vxpose.xlu0.c.b16.cont [5/8] 0, 128
        %223 = vxpose.xlu0.c.b16.cont [6/8] 0, 128
        %224 = vxpose.xlu0.c.b16.cont [7/8] 0, 128
        %225 = vxpose.xlu0.c.b16.end [8/8] 0, 128
        %v226 = vpop.trf.xlu0
        %v227 = vpop.trf.xlu0
        %v228 = vpop.trf.xlu0
        %v229 = vpop.trf.xlu0
        %v230 = vpop.trf.xlu0
        %v231 = vpop.trf.xlu0
        %v232 = vpop.trf.xlu0
        %v233 = vpop.trf.xlu0
        %vm234 = vcmask 64512
        %v236 = vsel %vm234, %v226, 0
        %vm238 = vcmask 1043456
        %v240 = vsel %vm238, %v214, 0
        %242 = vmatprep.subr.bf16.mxu0 0
        %243 = vmatpush1.bf16.msra.mxu0 %v240
        %244 = vmatprep.subr.bf16.mxu0 0
        %245 = vmatpush1.bf16.msra.mxu0 0
        %246 = vmatprep.subr.bf16.mxu0 0
        %247 = vmatpush1.bf16.msra.mxu0 0
        %248 = vmatprep.subr.bf16.mxu0 0
        %249 = vmatpush1.bf16.msra.mxu0 0
        %250 = vmatprep.subr.bf16.mxu0 0
        %251 = vmatpush1.bf16.msra.mxu0 0
        %252 = vmatprep.subr.bf16.mxu0 0
        %253 = vmatpush1.bf16.msra.mxu0 0
        %254 = vmatprep.subr.bf16.mxu0 0
        %255 = vmatpush1.bf16.msra.mxu0 0
        %256 = vmatprep.subr.bf16.mxu0 0
        %257 = vmatpush1.bf16.msra.mxu0 0
        %258 = vmatprep.subr.bf16.mxu0 0
        %259 = vmatpush1.bf16.msra.mxu0 0
        %260 = vmatprep.subr.bf16.mxu0 0
        %261 = vmatpush1.bf16.msra.mxu0 0
        %262 = vmatprep.subr.bf16.mxu0 0
        %263 = vmatpush1.bf16.msra.mxu0 0
        %264 = vmatprep.subr.bf16.mxu0 0
        %265 = vmatpush1.bf16.msra.mxu0 0
        %266 = vmatprep.subr.bf16.mxu0 0
        %267 = vmatpush1.bf16.msra.mxu0 0
        %268 = vmatprep.subr.bf16.mxu0 0
        %269 = vmatpush1.bf16.msra.mxu0 0
        %270 = vmatprep.subr.bf16.mxu0 0
        %271 = vmatpush1.bf16.msra.mxu0 0
        %272 = vmatprep.subr.bf16.mxu0 0
        %273 = vmatpush1.bf16.msra.mxu0 0
        %274 = vmatprep.mubr.bf16.mxu0 0
        %275 = vmatmul.mubr.bf16.gmra.mrb[0].mxu0 %v236
        %v276 = vpop.f32.mrb[0].mxu0
        %v277 = vadd.f32 %v215, %v276
        %v278 = vpop.f32.mrb[0].mxu0
        %v279 = vpop.f32.mrb[0].mxu0
        %v280 = vadd.f32 %v216, %v279
        %v281 = vpop.f32.mrb[0].mxu0
        %282 = vdwg.mxu0
        %v283 = vpack.c.bf16 %v280, %v277
        %v285 = vunpack.c.l.b16 %v283
        %v286 = vunpack.c.h.b16 %v283
        %v287 = vpack.c.b16 %v285, %v285
        %v288 = vpack.c.b16 %v286, %v286
        %vm291 = vcmask 257024
        %292 = vst.msk [vmem:[%s212] sm:$0xf] %vm291, %v287
        %293 = vst.msk [vmem:[%s212 + $0x4] sm:$0xf] %vm291, %v288
        %s294 = sand.u32 %s97, 1
        %s295 = scalar_lea.sflag [#allocation4], %s294
        %s296 = sand.u32 %s97, 1
        %s297 = smul.addr %s296, 8
        %s298 = scalar_lea.vmem [#allocation8], %s297
        // Predicated region
        $region45: #{tpu_custom_call.1} parent=31 // pred_check
          %p299 = pneg %p107
        $region46: #{tpu_custom_call.1} parent=31 // pred_check_branch
          %301 = sbr.rel (%p299) target = $region48
        $region47: #{tpu_custom_call.1} parent=31 // pred_region
          %s303 = ssub.s32 128, 128
          %304 = vsyncadd %s295, %s303
          %s305 = smul.addr %s21, 2
          %s306 = smul.addr %s305, 64
          %s307 = scalar_lea.hbm %s3, %s306
          %s308 = sshll.u32 %s298, 4
          %s309 = int_to_ptr.vmem [resolvable:$true] %s308
          %314 = dma.vmem_to_hbm [thread:$0]  %s309, 128, %s307, %s295, 64, 64, 4
        $region48: #{tpu_custom_call.1} parent=31 // pred_fallthru
          _
      $region32: #{tpu_custom_call.1} parent=5 // pred_fallthru
        _
      %p315 = scmp.le.s32.totalorder 2, %s16
      // Predicated region
      $region49: #{tpu_custom_call.1} parent=5 // pred_check
        %p316 = pneg %p315
      $region50: #{tpu_custom_call.1} parent=5 // pred_check_branch
        %318 = sbr.rel (%p316) target = $region52
      $region51: #{tpu_custom_call.1} parent=5 // pred_region
        %s319 = ssub.s32 %s16, 2
        // Predicated region
        $region53: #{tpu_custom_call.1} parent=51 // pred_check
          %p320 = pneg %p113
        $region54: #{tpu_custom_call.1} parent=51 // pred_check_branch
          %322 = sbr.rel (%p320) target = $region56
        $region55: #{tpu_custom_call.1} parent=51 // pred_region
          %s323 = sand.u32 %s98, 1
          %s324 = scalar_lea.sflag [#allocation4], %s323
          %s325 = sand.u32 %s98, 1
          %s326 = smul.addr %s325, 8
          %s327 = scalar_lea.vmem [#allocation8], %s326
          %328 = dma.done %s324, 128
        $region56: #{tpu_custom_call.1} parent=51 // pred_fallthru
          _
      $region52: #{tpu_custom_call.1} parent=5 // pred_fallthru
        _
    $region6: #{tpu_custom_call.1} parent=1 // loop_footer
      %s20 = sadd.s32 1, %s16
    $region7: #{tpu_custom_call.1} parent=1 // loop_footer_branch
      %15 = sbr.rel target = $region3
    $region8: #{tpu_custom_call.1} parent=1 // loop_exit
      _
    %329 = vsyncpa [#allocation3], 1
    %s330 = scalar_lea.sflag [#allocation3], 1
    %331 = vsyncpa %s330, 1
    %332 = vsyncpa [#allocation6], 1
    %333 = vsyncpa [#allocation4], 1
    %s334 = scalar_lea.sflag [#allocation4], 1
    %335 = vsyncpa %s334, 1

</llo_original>
